<compile_context>
chip_gen: v6e
topology: v6e:2x2x1
jax: 0.10.0
libtpu: 0.0.40
codegen_flags: <defaults>
</compile_context>

<pallas_src>
import functools

import jax
import jax.numpy as jnp
from jax.experimental import pallas as pl
from jax.experimental.pallas import tpu as pltpu

_LANE = 128
_SUBLANE = 8


def _round_up(n, m):
    return ((n + m - 1) // m) * m


def _make_mlp_kernel(nlayers, activation, in_features, compute_dtype):
    """Fused kernel: nlayers Linear layers, `activation` between all but the last."""

    if activation == "tanh":
        act = jnp.tanh
    else:  # module default: relu
        act = lambda v: jnp.maximum(v, 0.0)

    # K of layer 0 is tiny (e.g. 4): an MXU pass would be ~3% utilized with a
    # lane-sparse LHS, while the VALU slots in this kernel are mostly idle.
    use_vpu_first_layer = in_features <= 8

    def kernel(*refs):
        # refs = (x_ref, w0, b0, w1, b1, ..., w_{L-1}, b_{L-1}, o_ref)
        x_ref = refs[0]
        o_ref = refs[-1]
        h = x_ref[...].astype(jnp.float32)
        for l in range(nlayers):
            w_ref = refs[1 + 2 * l]
            b_ref = refs[2 + 2 * l]
            if l == 0 and use_vpu_first_layer:
                # VPU path: h0 = sum_k x[:, k:k+1] * w0[k, :] + b0   (all f32)
                w = w_ref[...].astype(jnp.float32)
                acc = jnp.zeros((h.shape[0], w.shape[1]), jnp.float32)
                for kk in range(in_features):
                    acc = acc + h[:, kk:kk + 1] * w[kk:kk + 1, :]
                h = acc + b_ref[...]
            else:
                # MXU path: bf16 (or f32) operands, f32 accumulation.
                h = jnp.dot(h.astype(compute_dtype), w_ref[...],
                            preferred_element_type=jnp.float32)
                h = h + b_ref[...]
            if l < nlayers - 1:
                h = act(h)
        o_ref[...] = h.astype(o_ref.dtype)

    return kernel


def pad_params(params, compute_dtype=jnp.bfloat16):
    """Pad hidden feature dims to 128 lanes and cast weights to compute_dtype.

    Called ONCE outside the per-call path so no padding/casting ops run per
    forward call.  Weights are stored [in, out].  The last layer's output dim
    is left unpadded (small HBM writeback); biases stay f32 (bias-add and the
    activation run in f32 on the VPU).
    """
    nlayers = len(params)
    padded = []
    for l, (w, b) in enumerate(params):
        k, n = w.shape
        k_pad = k if l == 0 else _round_up(k, _LANE)
        n_pad = n if l == nlayers - 1 else _round_up(n, _LANE)
        w_p = jnp.zeros((k_pad, n_pad), compute_dtype).at[:k, :n].set(
            w.astype(compute_dtype))
        b_p = jnp.zeros((1, n_pad), jnp.float32).at[0, :n].set(
            b.astype(jnp.float32))
        padded.append((w_p, b_p))
    return padded


@functools.partial(jax.jit, static_argnames=("tile_b", "activation"))
def mlp_forward(x, padded_params, *, tile_b=512, activation="relu"):
    """x: [batch, in_features]; padded_params from pad_params()."""
    nlayers = len(padded_params)
    batch, in_features = x.shape
    out_features = padded_params[-1][0].shape[1]
    compute_dtype = padded_params[0][0].dtype

    # ---- batch tiling ---------------------------------------------------
    #  * round tile_b UP to a multiple of 8 sublanes (Mosaic (8,128) rule),
    #  * never larger than the padded batch,
    #  * cap so there are >= 2 batch blocks when batch > 8: gives the
    #    'parallel' axis something to shard across v7x's two TensorCores and
    #    restores DMA <-> compute overlap on all generations,
    #  * otherwise keep tiles large (256-512 rows): this kernel is DMA /
    #    per-grid-step overhead bound, not vreg bound (especially on v5e).
    tile_b = _round_up(max(_SUBLANE, int(tile_b)), _SUBLANE)
    tile_b = min(tile_b, _round_up(batch, _SUBLANE))
    if batch > _SUBLANE:
        tile_b = min(tile_b, _round_up(-(-batch // 2), _SUBLANE))
    batch_pad = _round_up(batch, tile_b)
    if batch_pad != batch:
        x_p = jnp.zeros((batch_pad, in_features), x.dtype).at[:batch].set(x)
    else:
        x_p = x

    grid = (batch_pad // tile_b,)

    # x / out stream through the pipeline; weights & biases use a constant
    # block index so they are DMA'd once and stay VMEM-resident.
    in_specs = [pl.BlockSpec((tile_b, in_features), lambda i: (i, 0))]
    flat_inputs = [x_p]
    for w_p, b_p in padded_params:
        in_specs.append(pl.BlockSpec(w_p.shape, lambda i: (0, 0)))
        in_specs.append(pl.BlockSpec(b_p.shape, lambda i: (0, 0)))
        flat_inputs.append(w_p)
        flat_inputs.append(b_p)
    out_specs = pl.BlockSpec((tile_b, out_features), lambda i: (i, 0))

    # 32 MiB scoped VMEM fits every generation (v7x physical VMEM is 64 MiB);
    # resident weights + one activation tile here are well under 1 MiB.
    out_padded = pl.pallas_call(
        _make_mlp_kernel(nlayers, activation, in_features, compute_dtype),
        out_shape=jax.ShapeDtypeStruct((batch_pad, out_features), x.dtype),
        grid=grid,
        in_specs=in_specs,
        out_specs=out_specs,
        compiler_params=pltpu.CompilerParams(
            dimension_semantics=("parallel",),
            vmem_limit_bytes=32 * 1024 * 1024,
        ),
    )(*flat_inputs)

    return out_padded if batch_pad == batch else out_padded[:batch]


def init_mlp_params(key, input_size, hidden_size, output_size, nlayers=3):
    """Synthetic deterministic init mirroring the module's layer shapes.

    Weights N(0, 0.1) as in the module; biases are given small random values
    (instead of the module's zeros) purely so the test exercises the bias add.
    Weights are stored pre-transposed as [in, out].
    """
    sizes = [input_size] + [hidden_size] * (nlayers - 1) + [output_size]
    params = []
    for i in range(nlayers):
        key, wk, bk = jax.random.split(key, 3)
        w = 0.1 * jax.random.normal(wk, (sizes[i], sizes[i + 1]), dtype=jnp.float32)
        b = 0.1 * jax.random.normal(bk, (sizes[i + 1],), dtype=jnp.float32)
        params.append((w, b))
    return params


def mlp_reference(x, params, activation="relu"):
    act = jnp.tanh if activation == "tanh" else (lambda v: jnp.maximum(v, 0.0))
    hp = jax.lax.Precision.HIGHEST
    h = x
    for w, b in params[:-1]:
        h = act(jnp.dot(h, w, precision=hp) + b)
    w, b = params[-1]
    return jnp.dot(h, w, precision=hp) + b


if __name__ == "__main__":
    key = jax.random.PRNGKey(0)
    # FitzHugh-Nagumo MLP-ish sizes: 3 layers, 4 -> 32 -> 32 -> 2.
    batch, input_size, hidden_size, output_size, nlayers = 256, 4, 32, 2, 3

    key, xkey = jax.random.split(key)
    x = jax.random.normal(xkey, (batch, input_size), dtype=jnp.float32)
    params = init_mlp_params(key, input_size, hidden_size, output_size, nlayers)
    ref = mlp_reference(x, params)

    # ---- f32 compute path (tolerance covers XLA vs Mosaic f32-matmul
    #      single-/multi-pass bf16 MXU decomposition differences) ----------
    params_f32 = pad_params(params, compute_dtype=jnp.float32)
    out = jax.block_until_ready(mlp_forward(x, params_f32))
    assert out.shape == (batch, output_size), out.shape
    assert jnp.allclose(out, ref, atol=5e-3, rtol=5e-3), \
        float(jnp.max(jnp.abs(out - ref)))

    # ---- bf16 matmul inputs, f32 accumulation (default fast path) --------
    params_bf16 = pad_params(params, compute_dtype=jnp.bfloat16)
    out_bf16 = jax.block_until_ready(mlp_forward(x, params_bf16))
    assert out_bf16.shape == (batch, output_size)
    assert jnp.allclose(out_bf16, ref, atol=2e-2, rtol=2e-2), \
        float(jnp.max(jnp.abs(out_bf16 - ref)))

    # ---- ragged batch + tanh: exercises batch padding, 2-block grid,
    #      and the masked output tail --------------------------------------
    xb = jax.random.normal(jax.random.PRNGKey(1), (100, input_size), dtype=jnp.float32)
    out_t = jax.block_until_ready(mlp_forward(xb, params_f32, activation="tanh"))
    ref_t = mlp_reference(xb, params, activation="tanh")
    assert out_t.shape == (100, output_size)
    assert jnp.allclose(out_t, ref_t, atol=5e-3, rtol=5e-3), \
        float(jnp.max(jnp.abs(out_t - ref_t)))

    print("KERNEL_OK")
</pallas_src>

<mosaic_0001>
module attributes {stable_mosaic.version = 11 : i64} {
  func.func @kernel(%arg0: i32, %arg1: memref<128x4xf32, #tpu.memory_space<vmem>>, %arg2: memref<4x128xf32, #tpu.memory_space<vmem>>, %arg3: memref<1x128xf32, #tpu.memory_space<vmem>>, %arg4: memref<128x128xf32, #tpu.memory_space<vmem>>, %arg5: memref<1x128xf32, #tpu.memory_space<vmem>>, %arg6: memref<128x2xf32, #tpu.memory_space<vmem>>, %arg7: memref<1x2xf32, #tpu.memory_space<vmem>>, %arg8: memref<128x2xf32, #tpu.memory_space<vmem>>) attributes {dimension_semantics = [#tpu.dimension_semantics<parallel>], iteration_bounds = array<i64: 2>, scalar_prefetch = 0 : i64, scratch_operands = 0 : i64, tpu.core_type = #tpu.core_type<tc>, window_params = [{transform_indices = @transform_0, window_bounds = array<i64: 128, 4>}, {pipeline_mode = #tpu.pipeline_mode<synchronous>, transform_indices = @transform_1, window_bounds = array<i64: 4, 128>}, {pipeline_mode = #tpu.pipeline_mode<synchronous>, transform_indices = @transform_2, window_bounds = array<i64: 1, 128>}, {pipeline_mode = #tpu.pipeline_mode<synchronous>, transform_indices = @transform_3, window_bounds = array<i64: 128, 128>}, {pipeline_mode = #tpu.pipeline_mode<synchronous>, transform_indices = @transform_4, window_bounds = array<i64: 1, 128>}, {pipeline_mode = #tpu.pipeline_mode<synchronous>, transform_indices = @transform_5, window_bounds = array<i64: 128, 2>}, {pipeline_mode = #tpu.pipeline_mode<synchronous>, transform_indices = @transform_6, window_bounds = array<i64: 1, 2>}, {transform_indices = @transform_7, window_bounds = array<i64: 128, 2>}]} {
    %c0 = arith.constant 0 : index
    %c0_0 = arith.constant 0 : index
    %0 = vector.load %arg1[%c0, %c0_0] : memref<128x4xf32, #tpu.memory_space<vmem>>, vector<128x4xf32>
    %c0_1 = arith.constant 0 : index
    %c0_2 = arith.constant 0 : index
    %1 = vector.load %arg2[%c0_1, %c0_2] : memref<4x128xf32, #tpu.memory_space<vmem>>, vector<4x128xf32>
    %cst = arith.constant 0.000000e+00 : f32
    %2 = vector.broadcast %cst : f32 to vector<128x128xf32>
    %3 = vector.extract_strided_slice %0 {offsets = [0, 0], sizes = [128, 1], strides = [1, 1]} : vector<128x4xf32> to vector<128x1xf32>
    %4 = vector.extract_strided_slice %1 {offsets = [0, 0], sizes = [1, 128], strides = [1, 1]} : vector<4x128xf32> to vector<1x128xf32>
    %5 = vector.broadcast %3 : vector<128x1xf32> to vector<128x128xf32>
    %6 = vector.broadcast %4 : vector<1x128xf32> to vector<128x128xf32>
    %7 = arith.mulf %5, %6 : vector<128x128xf32>
    %8 = arith.addf %2, %7 : vector<128x128xf32>
    %9 = vector.extract_strided_slice %0 {offsets = [0, 1], sizes = [128, 1], strides = [1, 1]} : vector<128x4xf32> to vector<128x1xf32>
    %10 = vector.extract_strided_slice %1 {offsets = [1, 0], sizes = [1, 128], strides = [1, 1]} : vector<4x128xf32> to vector<1x128xf32>
    %11 = vector.broadcast %9 : vector<128x1xf32> to vector<128x128xf32>
    %12 = vector.broadcast %10 : vector<1x128xf32> to vector<128x128xf32>
    %13 = arith.mulf %11, %12 : vector<128x128xf32>
    %14 = arith.addf %8, %13 : vector<128x128xf32>
    %15 = vector.extract_strided_slice %0 {offsets = [0, 2], sizes = [128, 1], strides = [1, 1]} : vector<128x4xf32> to vector<128x1xf32>
    %16 = vector.extract_strided_slice %1 {offsets = [2, 0], sizes = [1, 128], strides = [1, 1]} : vector<4x128xf32> to vector<1x128xf32>
    %17 = vector.broadcast %15 : vector<128x1xf32> to vector<128x128xf32>
    %18 = vector.broadcast %16 : vector<1x128xf32> to vector<128x128xf32>
    %19 = arith.mulf %17, %18 : vector<128x128xf32>
    %20 = arith.addf %14, %19 : vector<128x128xf32>
    %21 = vector.extract_strided_slice %0 {offsets = [0, 3], sizes = [128, 1], strides = [1, 1]} : vector<128x4xf32> to vector<128x1xf32>
    %22 = vector.extract_strided_slice %1 {offsets = [3, 0], sizes = [1, 128], strides = [1, 1]} : vector<4x128xf32> to vector<1x128xf32>
    %23 = vector.broadcast %21 : vector<128x1xf32> to vector<128x128xf32>
    %24 = vector.broadcast %22 : vector<1x128xf32> to vector<128x128xf32>
    %25 = arith.mulf %23, %24 : vector<128x128xf32>
    %26 = arith.addf %20, %25 : vector<128x128xf32>
    %c0_3 = arith.constant 0 : index
    %c0_4 = arith.constant 0 : index
    %27 = vector.load %arg3[%c0_3, %c0_4] : memref<1x128xf32, #tpu.memory_space<vmem>>, vector<1x128xf32>
    %28 = vector.broadcast %27 : vector<1x128xf32> to vector<128x128xf32>
    %29 = arith.addf %26, %28 : vector<128x128xf32>
    %cst_5 = arith.constant 0.000000e+00 : f32
    %30 = vector.broadcast %cst_5 : f32 to vector<128x128xf32>
    %31 = arith.maximumf %29, %30 : vector<128x128xf32>
    %c0_6 = arith.constant 0 : index
    %c0_7 = arith.constant 0 : index
    %32 = vector.load %arg4[%c0_6, %c0_7] : memref<128x128xf32, #tpu.memory_space<vmem>>, vector<128x128xf32>
    %cst_8 = arith.constant dense<0.000000e+00> : vector<128x128xf32>
    %33 = tpu.matmul %31, %32, %cst_8 {dimension_numbers = #tpu.dot_dimension_numbers<[1], [0], [0], [1], [0, 0, 1, 1], [], []>} : vector<128x128xf32>, vector<128x128xf32>, vector<128x128xf32> -> vector<128x128xf32>
    %c0_9 = arith.constant 0 : index
    %c0_10 = arith.constant 0 : index
    %34 = vector.load %arg5[%c0_9, %c0_10] : memref<1x128xf32, #tpu.memory_space<vmem>>, vector<1x128xf32>
    %35 = vector.broadcast %34 : vector<1x128xf32> to vector<128x128xf32>
    %36 = arith.addf %33, %35 : vector<128x128xf32>
    %cst_11 = arith.constant 0.000000e+00 : f32
    %37 = vector.broadcast %cst_11 : f32 to vector<128x128xf32>
    %38 = arith.maximumf %36, %37 : vector<128x128xf32>
    %c0_12 = arith.constant 0 : index
    %c0_13 = arith.constant 0 : index
    %39 = vector.load %arg6[%c0_12, %c0_13] : memref<128x2xf32, #tpu.memory_space<vmem>>, vector<128x2xf32>
    %cst_14 = arith.constant dense<0.000000e+00> : vector<128x2xf32>
    %40 = tpu.matmul %38, %39, %cst_14 {dimension_numbers = #tpu.dot_dimension_numbers<[1], [0], [0], [1], [0, 0, 1, 1], [], []>} : vector<128x128xf32>, vector<128x2xf32>, vector<128x2xf32> -> vector<128x2xf32>
    %c0_15 = arith.constant 0 : index
    %c0_16 = arith.constant 0 : index
    %41 = vector.load %arg7[%c0_15, %c0_16] : memref<1x2xf32, #tpu.memory_space<vmem>>, vector<1x2xf32>
    %42 = vector.broadcast %41 : vector<1x2xf32> to vector<128x2xf32>
    %43 = arith.addf %40, %42 : vector<128x2xf32>
    %c0_17 = arith.constant 0 : index
    %c0_18 = arith.constant 0 : index
    %44 = vector.load %arg8[%c0_17, %c0_18] : memref<128x2xf32, #tpu.memory_space<vmem>>, vector<128x2xf32>
    tpu.vector_store %arg8[%c0_17, %c0_18], %43 {strides = array<i32>} : memref<128x2xf32, #tpu.memory_space<vmem>>, vector<128x2xf32>,
    return
  }
  func.func @transform_0(%arg0: i32) -> (i32, i32) {
    %c0_i32 = arith.constant 0 : i32
    %c0_i32_0 = arith.constant 0 : i32
    return %arg0, %c0_i32 : i32, i32
  }
  func.func @transform_1(%arg0: i32) -> (i32, i32) {
    %c0_i32 = arith.constant 0 : i32
    %c0_i32_0 = arith.constant 0 : i32
    %c0_i32_1 = arith.constant 0 : i32
    return %c0_i32, %c0_i32_0 : i32, i32
  }
  func.func @transform_2(%arg0: i32) -> (i32, i32) {
    %c0_i32 = arith.constant 0 : i32
    %c0_i32_0 = arith.constant 0 : i32
    %c0_i32_1 = arith.constant 0 : i32
    return %c0_i32, %c0_i32_0 : i32, i32
  }
  func.func @transform_3(%arg0: i32) -> (i32, i32) {
    %c0_i32 = arith.constant 0 : i32
    %c0_i32_0 = arith.constant 0 : i32
    %c0_i32_1 = arith.constant 0 : i32
    return %c0_i32, %c0_i32_0 : i32, i32
  }
  func.func @transform_4(%arg0: i32) -> (i32, i32) {
    %c0_i32 = arith.constant 0 : i32
    %c0_i32_0 = arith.constant 0 : i32
    %c0_i32_1 = arith.constant 0 : i32
    return %c0_i32, %c0_i32_0 : i32, i32
  }
  func.func @transform_5(%arg0: i32) -> (i32, i32) {
    %c0_i32 = arith.constant 0 : i32
    %c0_i32_0 = arith.constant 0 : i32
    %c0_i32_1 = arith.constant 0 : i32
    return %c0_i32, %c0_i32_0 : i32, i32
  }
  func.func @transform_6(%arg0: i32) -> (i32, i32) {
    %c0_i32 = arith.constant 0 : i32
    %c0_i32_0 = arith.constant 0 : i32
    %c0_i32_1 = arith.constant 0 : i32
    return %c0_i32, %c0_i32_0 : i32, i32
  }
  func.func @transform_7(%arg0: i32) -> (i32, i32) {
    %c0_i32 = arith.constant 0 : i32
    %c0_i32_0 = arith.constant 0 : i32
    return %arg0, %c0_i32 : i32, i32
  }
}

</mosaic_0001>

<llo_original>
// kernel: mlp_forward.1
$region0: #{mlp_forward.1}
  #allocation0 [shape = 'u32[]', space=smem, size = 0x4, offset = 0x4, fixed_abs, tag = 'smem constant byte address 0x4 - core index']
  #allocation1 [shape = 'u32[144,128]{1,0:T(1,128)}', space=vmem, size = 0x12000, scoped, tag = 'internal scratch']
  %s0 = inlined_call_operand.vmem [shape: f32[256,4], index: 0, kind: input, shape index: {}]
  %s1 = inlined_call_operand.vmem [shape: f32[4,128], index: 1, kind: input, shape index: {}]
  %s2 = inlined_call_operand.vmem [shape: f32[1,128], index: 2, kind: input, shape index: {}]
  %s3 = inlined_call_operand.vmem [shape: f32[128,128], index: 3, kind: input, shape index: {}]
  %s4 = inlined_call_operand.vmem [shape: f32[1,128], index: 4, kind: input, shape index: {}]
  %s5 = inlined_call_operand.vmem [shape: f32[128,2], index: 5, kind: input, shape index: {}]
  %s6 = inlined_call_operand.vmem [shape: f32[1,2], index: 6, kind: input, shape index: {}]
  %s7 = inlined_call_operand.vmem [shape: f32[256,2], index: 7, kind: output, shape index: {}]
  %s8 = sld [smem:[#allocation0]]
  $region61: #{mlp_forward.1} parent=0
    _
  %s10 = ssub.s32 1, %s8
  %s11 = scalar_select 0, %s10, %s8
  loop: start=0, step=1, limit=4
  $region2: #{mlp_forward.1} parent=0 // loop_pre_header
    _
  $region3: #{mlp_forward.1} parent=0 // loop_header
    %s13 = sphi 0, %s17
    %p14 = scmp.ge.s32.totalorder %s13, 4
    %s23 = sphi 0, %s25
    %s26 = sphi 0, %s23
    %s27 = sphi 0, %s26
    %s43 = sphi 0, %s27
    %s47 = sphi 0, %s47
    %s49 = sphi 0, %s47
    %s50 = sphi 0, %s49
    %s64 = sphi 0, %s50
    %s68 = sphi 0, %s68
    %s70 = sphi 0, %s68
    %s71 = sphi 0, %s70
    %s85 = sphi 0, %s71
    %s89 = sphi 0, %s89
    %s91 = sphi 0, %s89
    %s92 = sphi 0, %s91
    %s106 = sphi 0, %s92
    %s110 = sphi 0, %s110
    %s112 = sphi 0, %s110
    %s113 = sphi 0, %s112
    %s127 = sphi 0, %s113
    %s131 = sphi 0, %s131
    %s133 = sphi 0, %s131
    %s134 = sphi 0, %s133
    %s148 = sphi 0, %s134
    %s152 = sphi 0, %s152
    %s154 = sphi 0, %s152
    %s155 = sphi 0, %s154
    %s169 = sphi 0, %s155
    %s175 = sphi 0, %s177
    %s178 = sphi 0, %s175
    %s179 = sphi 0, %s178
    %s195 = sphi 0, %s179
  $region4: #{mlp_forward.1} parent=0 // loop_header_branch
    %16 = sbr.rel (%p14) target = $region8
  $region5: #{mlp_forward.1} parent=0 // loop_body
    %s18 = ssub.s32 %s13, 1
    %s19 = ssub.s32 %s13, 2
    %s20 = sadd.s32 %s13, 1
    %s21 = ssub.s32 %s13, %s20
    %p22 = scmp.eq.s32.totalorder %s21, 0
    %s24 = sadd.s32 %s23, 1
    %s25 = scalar_select %p22, %s23, %s24
    %p28 = pneg %p22
    %p29 = scmp.eq.s32.totalorder %s13, 1
    %p30 = por %p28, %p29
    %p31 = scmp.ne.s32.totalorder %s23, %s26
    %p32 = scmp.eq.s32.totalorder %s13, 0
    %p33 = por %p31, %p32
    %p34 = scmp.ne.s32.totalorder %s23, %s26
    %p35 = scmp.eq.s32.totalorder %s18, 1
    %p36 = por %p34, %p35
    %p37 = scmp.ne.s32.totalorder %s26, %s27
    %p38 = scmp.eq.s32.totalorder %s18, 0
    %p39 = por %p37, %p38
    %p40 = scmp.ne.s32.totalorder %s26, %s27
    %p41 = scmp.eq.s32.totalorder %s19, 1
    %p42 = por %p40, %p41
    %p44 = scmp.ne.s32.totalorder %s27, %s43
    %p45 = scmp.eq.s32.totalorder %s19, 0
    %p46 = por %p44, %p45
    %s48 = sadd.s32 %s47, 1
    %p51 = scmp.eq.s32.totalorder %s13, 1
    %p52 = scmp.ne.s32.totalorder %s47, %s49
    %p53 = scmp.eq.s32.totalorder %s13, 0
    %p54 = por %p52, %p53
    %p55 = scmp.ne.s32.totalorder %s47, %s49
    %p56 = scmp.eq.s32.totalorder %s18, 1
    %p57 = por %p55, %p56
    %p58 = scmp.ne.s32.totalorder %s49, %s50
    %p59 = scmp.eq.s32.totalorder %s18, 0
    %p60 = por %p58, %p59
    %p61 = scmp.ne.s32.totalorder %s49, %s50
    %p62 = scmp.eq.s32.totalorder %s19, 1
    %p63 = por %p61, %p62
    %p65 = scmp.ne.s32.totalorder %s50, %s64
    %p66 = scmp.eq.s32.totalorder %s19, 0
    %p67 = por %p65, %p66
    %s69 = sadd.s32 %s68, 1
    %p72 = scmp.eq.s32.totalorder %s13, 1
    %p73 = scmp.ne.s32.totalorder %s68, %s70
    %p74 = scmp.eq.s32.totalorder %s13, 0
    %p75 = por %p73, %p74
    %p76 = scmp.ne.s32.totalorder %s68, %s70
    %p77 = scmp.eq.s32.totalorder %s18, 1
    %p78 = por %p76, %p77
    %p79 = scmp.ne.s32.totalorder %s70, %s71
    %p80 = scmp.eq.s32.totalorder %s18, 0
    %p81 = por %p79, %p80
    %p82 = scmp.ne.s32.totalorder %s70, %s71
    %p83 = scmp.eq.s32.totalorder %s19, 1
    %p84 = por %p82, %p83
    %p86 = scmp.ne.s32.totalorder %s71, %s85
    %p87 = scmp.eq.s32.totalorder %s19, 0
    %p88 = por %p86, %p87
    %s90 = sadd.s32 %s89, 1
    %p93 = scmp.eq.s32.totalorder %s13, 1
    %p94 = scmp.ne.s32.totalorder %s89, %s91
    %p95 = scmp.eq.s32.totalorder %s13, 0
    %p96 = por %p94, %p95
    %p97 = scmp.ne.s32.totalorder %s89, %s91
    %p98 = scmp.eq.s32.totalorder %s18, 1
    %p99 = por %p97, %p98
    %p100 = scmp.ne.s32.totalorder %s91, %s92
    %p101 = scmp.eq.s32.totalorder %s18, 0
    %p102 = por %p100, %p101
    %p103 = scmp.ne.s32.totalorder %s91, %s92
    %p104 = scmp.eq.s32.totalorder %s19, 1
    %p105 = por %p103, %p104
    %p107 = scmp.ne.s32.totalorder %s92, %s106
    %p108 = scmp.eq.s32.totalorder %s19, 0
    %p109 = por %p107, %p108
    %s111 = sadd.s32 %s110, 1
    %p114 = scmp.eq.s32.totalorder %s13, 1
    %p115 = scmp.ne.s32.totalorder %s110, %s112
    %p116 = scmp.eq.s32.totalorder %s13, 0
    %p117 = por %p115, %p116
    %p118 = scmp.ne.s32.totalorder %s110, %s112
    %p119 = scmp.eq.s32.totalorder %s18, 1
    %p120 = por %p118, %p119
    %p121 = scmp.ne.s32.totalorder %s112, %s113
    %p122 = scmp.eq.s32.totalorder %s18, 0
    %p123 = por %p121, %p122
    %p124 = scmp.ne.s32.totalorder %s112, %s113
    %p125 = scmp.eq.s32.totalorder %s19, 1
    %p126 = por %p124, %p125
    %p128 = scmp.ne.s32.totalorder %s113, %s127
    %p129 = scmp.eq.s32.totalorder %s19, 0
    %p130 = por %p128, %p129
    %s132 = sadd.s32 %s131, 1
    %p135 = scmp.eq.s32.totalorder %s13, 1
    %p136 = scmp.ne.s32.totalorder %s131, %s133
    %p137 = scmp.eq.s32.totalorder %s13, 0
    %p138 = por %p136, %p137
    %p139 = scmp.ne.s32.totalorder %s131, %s133
    %p140 = scmp.eq.s32.totalorder %s18, 1
    %p141 = por %p139, %p140
    %p142 = scmp.ne.s32.totalorder %s133, %s134
    %p143 = scmp.eq.s32.totalorder %s18, 0
    %p144 = por %p142, %p143
    %p145 = scmp.ne.s32.totalorder %s133, %s134
    %p146 = scmp.eq.s32.totalorder %s19, 1
    %p147 = por %p145, %p146
    %p149 = scmp.ne.s32.totalorder %s134, %s148
    %p150 = scmp.eq.s32.totalorder %s19, 0
    %p151 = por %p149, %p150
    %s153 = sadd.s32 %s152, 1
    %p156 = scmp.eq.s32.totalorder %s13, 1
    %p157 = scmp.ne.s32.totalorder %s152, %s154
    %p158 = scmp.eq.s32.totalorder %s13, 0
    %p159 = por %p157, %p158
    %p160 = scmp.ne.s32.totalorder %s152, %s154
    %p161 = scmp.eq.s32.totalorder %s18, 1
    %p162 = por %p160, %p161
    %p163 = scmp.ne.s32.totalorder %s154, %s155
    %p164 = scmp.eq.s32.totalorder %s18, 0
    %p165 = por %p163, %p164
    %p166 = scmp.ne.s32.totalorder %s154, %s155
    %p167 = scmp.eq.s32.totalorder %s19, 1
    %p168 = por %p166, %p167
    %p170 = scmp.ne.s32.totalorder %s155, %s169
    %p171 = scmp.eq.s32.totalorder %s19, 0
    %p172 = por %p170, %p171
    %s173 = ssub.s32 %s13, %s20
    %p174 = scmp.eq.s32.totalorder %s173, 0
    %s176 = sadd.s32 %s175, 1
    %s177 = scalar_select %p174, %s175, %s176
    %p180 = pneg %p174
    %p181 = scmp.eq.s32.totalorder %s13, 1
    %p182 = por %p180, %p181
    %p183 = scmp.ne.s32.totalorder %s175, %s178
    %p184 = scmp.eq.s32.totalorder %s13, 0
    %p185 = por %p183, %p184
    %p186 = scmp.ne.s32.totalorder %s175, %s178
    %p187 = scmp.eq.s32.totalorder %s18, 1
    %p188 = por %p186, %p187
    %p189 = scmp.ne.s32.totalorder %s178, %s179
    %p190 = scmp.eq.s32.totalorder %s18, 0
    %p191 = por %p189, %p190
    %p192 = scmp.ne.s32.totalorder %s178, %s179
    %p193 = scmp.eq.s32.totalorder %s19, 1
    %p194 = por %p192, %p193
    %p196 = scmp.ne.s32.totalorder %s179, %s195
    %p197 = scmp.eq.s32.totalorder %s19, 0
    %p198 = por %p196, %p197
    %p199 = scmp.le.s32.totalorder 1, %s13
    %p200 = scmp.lt.s32.totalorder %s13, 3
    %p201 = pnand %p199, %p200
    %p202 = pneg %p201
    // Predicated region
    $region9: #{mlp_forward.1} parent=5 // pred_check
      _
    $region10: #{mlp_forward.1} parent=5 // pred_check_branch
      %204 = sbr.rel (%p201) target = $region12
    $region11: #{mlp_forward.1} parent=5 // pred_region
      %s205 = ssub.s32 %s13, 1
      // Predicated region
      $region13: #{mlp_forward.1} parent=11 // pred_check
        %p206 = pneg %p60
      $region14: #{mlp_forward.1} parent=11 // pred_check_branch
        %208 = sbr.rel (%p206) target = $region16
      $region15: #{mlp_forward.1} parent=11 // pred_region
        _
      $region16: #{mlp_forward.1} parent=11 // pred_fallthru
        _
      // Predicated region
      $region17: #{mlp_forward.1} parent=11 // pred_check
        %p209 = pneg %p81
      $region18: #{mlp_forward.1} parent=11 // pred_check_branch
        %211 = sbr.rel (%p209) target = $region20
      $region19: #{mlp_forward.1} parent=11 // pred_region
        _
      $region20: #{mlp_forward.1} parent=11 // pred_fallthru
        _
      // Predicated region
      $region21: #{mlp_forward.1} parent=11 // pred_check
        %p212 = pneg %p102
      $region22: #{mlp_forward.1} parent=11 // pred_check_branch
        %214 = sbr.rel (%p212) target = $region24
      $region23: #{mlp_forward.1} parent=11 // pred_region
        _
      $region24: #{mlp_forward.1} parent=11 // pred_fallthru
        _
      // Predicated region
      $region25: #{mlp_forward.1} parent=11 // pred_check
        %p215 = pneg %p123
      $region26: #{mlp_forward.1} parent=11 // pred_check_branch
        %217 = sbr.rel (%p215) target = $region28
      $region27: #{mlp_forward.1} parent=11 // pred_region
        _
      $region28: #{mlp_forward.1} parent=11 // pred_fallthru
        _
      // Predicated region
      $region29: #{mlp_forward.1} parent=11 // pred_check
        %p218 = pneg %p144
      $region30: #{mlp_forward.1} parent=11 // pred_check_branch
        %220 = sbr.rel (%p218) target = $region32
      $region31: #{mlp_forward.1} parent=11 // pred_region
        _
      $region32: #{mlp_forward.1} parent=11 // pred_fallthru
        _
      // Predicated region
      $region33: #{mlp_forward.1} parent=11 // pred_check
        %p221 = pneg %p165
      $region34: #{mlp_forward.1} parent=11 // pred_check_branch
        %223 = sbr.rel (%p221) target = $region36
      $region35: #{mlp_forward.1} parent=11 // pred_region
        _
      $region36: #{mlp_forward.1} parent=11 // pred_fallthru
        _
    $region12: #{mlp_forward.1} parent=5 // pred_fallthru
      _
    %p224 = scmp.lt.s32.totalorder %s13, 2
    // Predicated region
    $region37: #{mlp_forward.1} parent=5 // pred_check
      %p225 = pneg %p224
    $region38: #{mlp_forward.1} parent=5 // pred_check_branch
      %227 = sbr.rel (%p225) target = $region40
    $region39: #{mlp_forward.1} parent=5 // pred_region
      // Predicated region
      $region41: #{mlp_forward.1} parent=39 // pred_check
        %p228 = pneg %p33
      $region42: #{mlp_forward.1} parent=39 // pred_check_branch
        %230 = sbr.rel (%p228) target = $region44
      $region43: #{mlp_forward.1} parent=39 // pred_region
        %s231 = smul.u32 16, %s13
        %p232 = scmp.lt.s32.totalorder %s231, 31
        %s233 = scalar_select %p232, %s231, 31
        %s234 = smul.addr %s233, 8
        %s235 = scalar_lea.vmem %s0, %s234
        %s236 = smul.u32 16, %s13
      $region44: #{mlp_forward.1} parent=39 // pred_fallthru
        _
    $region40: #{mlp_forward.1} parent=5 // pred_fallthru
      _
    %p237 = scmp.le.s32.totalorder 1, %s13
    %p238 = scmp.lt.s32.totalorder %s13, 3
    %p239 = pnand %p237, %p238
    %p240 = pneg %p239
    // Predicated region
    $region45: #{mlp_forward.1} parent=5 // pred_check
      _
    $region46: #{mlp_forward.1} parent=5 // pred_check_branch
      %242 = sbr.rel (%p239) target = $region48
    $region47: #{mlp_forward.1} parent=5 // pred_region
      %s243 = ssub.s32 %s13, 1
      %s244 = smul.u32 16, %s18
      %p245 = scmp.lt.s32.totalorder %s244, 31
      %s246 = scalar_select %p245, %s244, 31
      %s247 = smul.addr %s246, 8
      %s248 = scalar_lea.vmem %s0, %s247
      %p249 = pneg %p39
      %p250 = pneg %p36
      %p251 = pneg %p60
      %p252 = pneg %p57
      %p253 = pneg %p81
      %p254 = pneg %p78
      %p255 = pneg %p102
      %p256 = pneg %p99
      %p257 = pneg %p123
      %p258 = pneg %p120
      %p259 = pneg %p144
      %p260 = pneg %p141
      %p261 = pneg %p165
      %p262 = pneg %p162
      %p263 = pneg %p191
      %p264 = pneg %p188
      %s265 = smul.u32 16, %s18
      %p266 = scmp.lt.s32.totalorder %s265, 31
      %s267 = scalar_select %p266, %s265, 31
      %s268 = smul.addr %s267, 8
      %s269 = scalar_lea.vmem %s7, %s268
      %s270 = smul.u32 16, %s18
      %p271 = scmp.lt.s32.totalorder %s270, 31
      %s272 = scalar_select %p271, %s270, 31
      %s273 = smul.addr %s272, 8
      %s274 = scalar_lea.vmem %s0, %s273
      %s275 = smul.u32 16, %s18
      %s276 = smul.u32 16, %s18
      %p277 = scmp.lt.s32.totalorder %s276, 31
      %s278 = scalar_select %p277, %s276, 31
      %s279 = smul.addr %s278, 8
      %s280 = scalar_lea.vmem %s7, %s279
      %s281 = smul.u32 16, %s18
      %v282 = vld [vmem:[%s274] sm:$0xff]
      %v283 = vld [vmem:[%s274 + $0x8] sm:$0xff]
      %v284 = vld [vmem:[%s274 + $0x10] sm:$0xff]
      %v285 = vld [vmem:[%s274 + $0x18] sm:$0xff]
      %v286 = vld [vmem:[%s274 + $0x20] sm:$0xff]
      %v287 = vld [vmem:[%s274 + $0x28] sm:$0xff]
      %v288 = vld [vmem:[%s274 + $0x30] sm:$0xff]
      %v289 = vld [vmem:[%s274 + $0x38] sm:$0xff]
      %v290 = vld [vmem:[%s274 + $0x40] sm:$0xff]
      %v291 = vld [vmem:[%s274 + $0x48] sm:$0xff]
      %v292 = vld [vmem:[%s274 + $0x50] sm:$0xff]
      %v293 = vld [vmem:[%s274 + $0x58] sm:$0xff]
      %v294 = vld [vmem:[%s274 + $0x60] sm:$0xff]
      %v295 = vld [vmem:[%s274 + $0x68] sm:$0xff]
      %v296 = vld [vmem:[%s274 + $0x70] sm:$0xff]
      %v297 = vld [vmem:[%s274 + $0x78] sm:$0xff]
      %v298 = vld [vmem:[%s1] sm:$0xf]
      %300 = vset.pattern.permute.xlu0 0
      %301 = vperm.xlu0 %300, %v282
      %v302 = vpop.permute.xlu0 %301
      %305 = vset.pattern.permute.xlu0 0
      %306 = vperm.xlu0 %305, %v283
      %v307 = vpop.permute.xlu0 %306
      %310 = vset.pattern.permute.xlu0 0
      %311 = vperm.xlu0 %310, %v284
      %v312 = vpop.permute.xlu0 %311
      %315 = vset.pattern.permute.xlu0 0
      %316 = vperm.xlu0 %315, %v285
      %v317 = vpop.permute.xlu0 %316
      %320 = vset.pattern.permute.xlu0 0
      %321 = vperm.xlu0 %320, %v286
      %v322 = vpop.permute.xlu0 %321
      %325 = vset.pattern.permute.xlu0 0
      %326 = vperm.xlu0 %325, %v287
      %v327 = vpop.permute.xlu0 %326
      %330 = vset.pattern.permute.xlu0 0
      %331 = vperm.xlu0 %330, %v288
      %v332 = vpop.permute.xlu0 %331
      %335 = vset.pattern.permute.xlu0 0
      %336 = vperm.xlu0 %335, %v289
      %v337 = vpop.permute.xlu0 %336
      %340 = vset.pattern.permute.xlu0 0
      %341 = vperm.xlu0 %340, %v290
      %v342 = vpop.permute.xlu0 %341
      %345 = vset.pattern.permute.xlu0 0
      %346 = vperm.xlu0 %345, %v291
      %v347 = vpop.permute.xlu0 %346
      %350 = vset.pattern.permute.xlu0 0
      %351 = vperm.xlu0 %350, %v292
      %v352 = vpop.permute.xlu0 %351
      %355 = vset.pattern.permute.xlu0 0
      %356 = vperm.xlu0 %355, %v293
      %v357 = vpop.permute.xlu0 %356
      %360 = vset.pattern.permute.xlu0 0
      %361 = vperm.xlu0 %360, %v294
      %v362 = vpop.permute.xlu0 %361
      %365 = vset.pattern.permute.xlu0 0
      %366 = vperm.xlu0 %365, %v295
      %v367 = vpop.permute.xlu0 %366
      %370 = vset.pattern.permute.xlu0 0
      %371 = vperm.xlu0 %370, %v296
      %v372 = vpop.permute.xlu0 %371
      %375 = vset.pattern.permute.xlu0 0
      %376 = vperm.xlu0 %375, %v297
      %v377 = vpop.permute.xlu0 %376
      %v379 = vlaneseq
      %v380 = vshrl.u32 %v379, 7
      %v381 = vsub.s32 0, %v380
      %v382 = vrot.slane %v298, %v381
      %v383 = vmul.f32 %v302, %v382
      %v384 = vmul.f32 %v307, %v382
      %v385 = vmul.f32 %v312, %v382
      %v386 = vmul.f32 %v317, %v382
      %v387 = vmul.f32 %v322, %v382
      %v388 = vmul.f32 %v327, %v382
      %v389 = vmul.f32 %v332, %v382
      %v390 = vmul.f32 %v337, %v382
      %v391 = vmul.f32 %v342, %v382
      %v392 = vmul.f32 %v347, %v382
      %v393 = vmul.f32 %v352, %v382
      %v394 = vmul.f32 %v357, %v382
      %v395 = vmul.f32 %v362, %v382
      %v396 = vmul.f32 %v367, %v382
      %v397 = vmul.f32 %v372, %v382
      %v398 = vmul.f32 %v377, %v382
      %v399 = vadd.f32 %v383, 0.0
      %v400 = vadd.f32 %v384, 0.0
      %v401 = vadd.f32 %v385, 0.0
      %v402 = vadd.f32 %v386, 0.0
      %v403 = vadd.f32 %v387, 0.0
      %v404 = vadd.f32 %v388, 0.0
      %v405 = vadd.f32 %v389, 0.0
      %v406 = vadd.f32 %v390, 0.0
      %v407 = vadd.f32 %v391, 0.0
      %v408 = vadd.f32 %v392, 0.0
      %v409 = vadd.f32 %v393, 0.0
      %v410 = vadd.f32 %v394, 0.0
      %v411 = vadd.f32 %v395, 0.0
      %v412 = vadd.f32 %v396, 0.0
      %v413 = vadd.f32 %v397, 0.0
      %v414 = vadd.f32 %v398, 0.0
      %415 = vset.pattern.permute.xlu0 1
      %416 = vperm.xlu0 %415, %v282
      %v417 = vpop.permute.xlu0 %416
      %419 = vset.pattern.permute.xlu0 1
      %420 = vperm.xlu0 %419, %v283
      %v421 = vpop.permute.xlu0 %420
      %423 = vset.pattern.permute.xlu0 1
      %424 = vperm.xlu0 %423, %v284
      %v425 = vpop.permute.xlu0 %424
      %427 = vset.pattern.permute.xlu0 1
      %428 = vperm.xlu0 %427, %v285
      %v429 = vpop.permute.xlu0 %428
      %431 = vset.pattern.permute.xlu0 1
      %432 = vperm.xlu0 %431, %v286
      %v433 = vpop.permute.xlu0 %432
      %435 = vset.pattern.permute.xlu0 1
      %436 = vperm.xlu0 %435, %v287
      %v437 = vpop.permute.xlu0 %436
      %439 = vset.pattern.permute.xlu0 1
      %440 = vperm.xlu0 %439, %v288
      %v441 = vpop.permute.xlu0 %440
      %443 = vset.pattern.permute.xlu0 1
      %444 = vperm.xlu0 %443, %v289
      %v445 = vpop.permute.xlu0 %444
      %447 = vset.pattern.permute.xlu0 1
      %448 = vperm.xlu0 %447, %v290
      %v449 = vpop.permute.xlu0 %448
      %451 = vset.pattern.permute.xlu0 1
      %452 = vperm.xlu0 %451, %v291
      %v453 = vpop.permute.xlu0 %452
      %455 = vset.pattern.permute.xlu0 1
      %456 = vperm.xlu0 %455, %v292
      %v457 = vpop.permute.xlu0 %456
      %459 = vset.pattern.permute.xlu0 1
      %460 = vperm.xlu0 %459, %v293
      %v461 = vpop.permute.xlu0 %460
      %463 = vset.pattern.permute.xlu0 1
      %464 = vperm.xlu0 %463, %v294
      %v465 = vpop.permute.xlu0 %464
      %467 = vset.pattern.permute.xlu0 1
      %468 = vperm.xlu0 %467, %v295
      %v469 = vpop.permute.xlu0 %468
      %471 = vset.pattern.permute.xlu0 1
      %472 = vperm.xlu0 %471, %v296
      %v473 = vpop.permute.xlu0 %472
      %475 = vset.pattern.permute.xlu0 1
      %476 = vperm.xlu0 %475, %v297
      %v477 = vpop.permute.xlu0 %476
      %v479 = vlaneseq
      %v480 = vshrl.u32 %v479, 7
      %v481 = vsub.s32 1, %v480
      %v482 = vrot.slane %v298, %v481
      %v483 = vmul.f32 %v417, %v482
      %v484 = vmul.f32 %v421, %v482
      %v485 = vmul.f32 %v425, %v482
      %v486 = vmul.f32 %v429, %v482
      %v487 = vmul.f32 %v433, %v482
      %v488 = vmul.f32 %v437, %v482
      %v489 = vmul.f32 %v441, %v482
      %v490 = vmul.f32 %v445, %v482
      %v491 = vmul.f32 %v449, %v482
      %v492 = vmul.f32 %v453, %v482
      %v493 = vmul.f32 %v457, %v482
      %v494 = vmul.f32 %v461, %v482
      %v495 = vmul.f32 %v465, %v482
      %v496 = vmul.f32 %v469, %v482
      %v497 = vmul.f32 %v473, %v482
      %v498 = vmul.f32 %v477, %v482
      %v499 = vadd.f32 %v399, %v483
      %v500 = vadd.f32 %v400, %v484
      %v501 = vadd.f32 %v401, %v485
      %v502 = vadd.f32 %v402, %v486
      %v503 = vadd.f32 %v403, %v487
      %v504 = vadd.f32 %v404, %v488
      %v505 = vadd.f32 %v405, %v489
      %v506 = vadd.f32 %v406, %v490
      %v507 = vadd.f32 %v407, %v491
      %v508 = vadd.f32 %v408, %v492
      %v509 = vadd.f32 %v409, %v493
      %v510 = vadd.f32 %v410, %v494
      %v511 = vadd.f32 %v411, %v495
      %v512 = vadd.f32 %v412, %v496
      %v513 = vadd.f32 %v413, %v497
      %v514 = vadd.f32 %v414, %v498
      %515 = vset.pattern.permute.xlu0 2
      %516 = vperm.xlu0 %515, %v282
      %v517 = vpop.permute.xlu0 %516
      %519 = vset.pattern.permute.xlu0 2
      %520 = vperm.xlu0 %519, %v283
      %v521 = vpop.permute.xlu0 %520
      %523 = vset.pattern.permute.xlu0 2
      %524 = vperm.xlu0 %523, %v284
      %v525 = vpop.permute.xlu0 %524
      %527 = vset.pattern.permute.xlu0 2
      %528 = vperm.xlu0 %527, %v285
      %v529 = vpop.permute.xlu0 %528
      %531 = vset.pattern.permute.xlu0 2
      %532 = vperm.xlu0 %531, %v286
      %v533 = vpop.permute.xlu0 %532
      %535 = vset.pattern.permute.xlu0 2
      %536 = vperm.xlu0 %535, %v287
      %v537 = vpop.permute.xlu0 %536
      %539 = vset.pattern.permute.xlu0 2
      %540 = vperm.xlu0 %539, %v288
      %v541 = vpop.permute.xlu0 %540
      %543 = vset.pattern.permute.xlu0 2
      %544 = vperm.xlu0 %543, %v289
      %v545 = vpop.permute.xlu0 %544
      %547 = vset.pattern.permute.xlu0 2
      %548 = vperm.xlu0 %547, %v290
      %v549 = vpop.permute.xlu0 %548
      %551 = vset.pattern.permute.xlu0 2
      %552 = vperm.xlu0 %551, %v291
      %v553 = vpop.permute.xlu0 %552
      %555 = vset.pattern.permute.xlu0 2
      %556 = vperm.xlu0 %555, %v292
      %v557 = vpop.permute.xlu0 %556
      %559 = vset.pattern.permute.xlu0 2
      %560 = vperm.xlu0 %559, %v293
      %v561 = vpop.permute.xlu0 %560
      %563 = vset.pattern.permute.xlu0 2
      %564 = vperm.xlu0 %563, %v294
      %v565 = vpop.permute.xlu0 %564
      %567 = vset.pattern.permute.xlu0 2
      %568 = vperm.xlu0 %567, %v295
      %v569 = vpop.permute.xlu0 %568
      %571 = vset.pattern.permute.xlu0 2
      %572 = vperm.xlu0 %571, %v296
      %v573 = vpop.permute.xlu0 %572
      %575 = vset.pattern.permute.xlu0 2
      %576 = vperm.xlu0 %575, %v297
      %v577 = vpop.permute.xlu0 %576
      %v579 = vlaneseq
      %v580 = vshrl.u32 %v579, 7
      %v581 = vsub.s32 2, %v580
      %v582 = vrot.slane %v298, %v581
      %v583 = vmul.f32 %v517, %v582
      %v584 = vmul.f32 %v521, %v582
      %v585 = vmul.f32 %v525, %v582
      %v586 = vmul.f32 %v529, %v582
      %v587 = vmul.f32 %v533, %v582
      %v588 = vmul.f32 %v537, %v582
      %v589 = vmul.f32 %v541, %v582
      %v590 = vmul.f32 %v545, %v582
      %v591 = vmul.f32 %v549, %v582
      %v592 = vmul.f32 %v553, %v582
      %v593 = vmul.f32 %v557, %v582
      %v594 = vmul.f32 %v561, %v582
      %v595 = vmul.f32 %v565, %v582
      %v596 = vmul.f32 %v569, %v582
      %v597 = vmul.f32 %v573, %v582
      %v598 = vmul.f32 %v577, %v582
      %v599 = vadd.f32 %v499, %v583
      %v600 = vadd.f32 %v500, %v584
      %v601 = vadd.f32 %v501, %v585
      %v602 = vadd.f32 %v502, %v586
      %v603 = vadd.f32 %v503, %v587
      %v604 = vadd.f32 %v504, %v588
      %v605 = vadd.f32 %v505, %v589
      %v606 = vadd.f32 %v506, %v590
      %v607 = vadd.f32 %v507, %v591
      %v608 = vadd.f32 %v508, %v592
      %v609 = vadd.f32 %v509, %v593
      %v610 = vadd.f32 %v510, %v594
      %v611 = vadd.f32 %v511, %v595
      %v612 = vadd.f32 %v512, %v596
      %v613 = vadd.f32 %v513, %v597
      %v614 = vadd.f32 %v514, %v598
      %615 = vset.pattern.permute.xlu0 3
      %616 = vperm.xlu0 %615, %v282
      %v617 = vpop.permute.xlu0 %616
      %619 = vset.pattern.permute.xlu0 3
      %620 = vperm.xlu0 %619, %v283
      %v621 = vpop.permute.xlu0 %620
      %623 = vset.pattern.permute.xlu0 3
      %624 = vperm.xlu0 %623, %v284
      %v625 = vpop.permute.xlu0 %624
      %627 = vset.pattern.permute.xlu0 3
      %628 = vperm.xlu0 %627, %v285
      %v629 = vpop.permute.xlu0 %628
      %631 = vset.pattern.permute.xlu0 3
      %632 = vperm.xlu0 %631, %v286
      %v633 = vpop.permute.xlu0 %632
      %635 = vset.pattern.permute.xlu0 3
      %636 = vperm.xlu0 %635, %v287
      %v637 = vpop.permute.xlu0 %636
      %639 = vset.pattern.permute.xlu0 3
      %640 = vperm.xlu0 %639, %v288
      %v641 = vpop.permute.xlu0 %640
      %643 = vset.pattern.permute.xlu0 3
      %644 = vperm.xlu0 %643, %v289
      %v645 = vpop.permute.xlu0 %644
      %647 = vset.pattern.permute.xlu0 3
      %648 = vperm.xlu0 %647, %v290
      %v649 = vpop.permute.xlu0 %648
      %651 = vset.pattern.permute.xlu0 3
      %652 = vperm.xlu0 %651, %v291
      %v653 = vpop.permute.xlu0 %652
      %655 = vset.pattern.permute.xlu0 3
      %656 = vperm.xlu0 %655, %v292
      %v657 = vpop.permute.xlu0 %656
      %659 = vset.pattern.permute.xlu0 3
      %660 = vperm.xlu0 %659, %v293
      %v661 = vpop.permute.xlu0 %660
      %663 = vset.pattern.permute.xlu0 3
      %664 = vperm.xlu0 %663, %v294
      %v665 = vpop.permute.xlu0 %664
      %667 = vset.pattern.permute.xlu0 3
      %668 = vperm.xlu0 %667, %v295
      %v669 = vpop.permute.xlu0 %668
      %671 = vset.pattern.permute.xlu0 3
      %672 = vperm.xlu0 %671, %v296
      %v673 = vpop.permute.xlu0 %672
      %675 = vset.pattern.permute.xlu0 3
      %676 = vperm.xlu0 %675, %v297
      %v677 = vpop.permute.xlu0 %676
      %v679 = vlaneseq
      %v680 = vshrl.u32 %v679, 7
      %v681 = vsub.s32 3, %v680
      %v682 = vrot.slane %v298, %v681
      %v683 = vmul.f32 %v617, %v682
      %v684 = vmul.f32 %v621, %v682
      %v685 = vmul.f32 %v625, %v682
      %v686 = vmul.f32 %v629, %v682
      %v687 = vmul.f32 %v633, %v682
      %v688 = vmul.f32 %v637, %v682
      %v689 = vmul.f32 %v641, %v682
      %v690 = vmul.f32 %v645, %v682
      %v691 = vmul.f32 %v649, %v682
      %v692 = vmul.f32 %v653, %v682
      %v693 = vmul.f32 %v657, %v682
      %v694 = vmul.f32 %v661, %v682
      %v695 = vmul.f32 %v665, %v682
      %v696 = vmul.f32 %v669, %v682
      %v697 = vmul.f32 %v673, %v682
      %v698 = vmul.f32 %v677, %v682
      %v699 = vadd.f32 %v599, %v683
      %v700 = vadd.f32 %v600, %v684
      %v701 = vadd.f32 %v601, %v685
      %v702 = vadd.f32 %v602, %v686
      %v703 = vadd.f32 %v603, %v687
      %v704 = vadd.f32 %v604, %v688
      %v705 = vadd.f32 %v605, %v689
      %v706 = vadd.f32 %v606, %v690
      %v707 = vadd.f32 %v607, %v691
      %v708 = vadd.f32 %v608, %v692
      %v709 = vadd.f32 %v609, %v693
      %v710 = vadd.f32 %v610, %v694
      %v711 = vadd.f32 %v611, %v695
      %v712 = vadd.f32 %v612, %v696
      %v713 = vadd.f32 %v613, %v697
      %v714 = vadd.f32 %v614, %v698
      %v715 = vld [vmem:[%s2] sm:$0x1]
      %v717 = vlaneseq
      %v718 = vshrl.u32 %v717, 7
      %v719 = vsub.s32 0, %v718
      %v720 = vrot.slane %v715, %v719
      %v722 = vadd.f32 %v699, %v720
      %v723 = vadd.f32 %v700, %v720
      %v724 = vadd.f32 %v701, %v720
      %v725 = vadd.f32 %v702, %v720
      %v726 = vadd.f32 %v703, %v720
      %v727 = vadd.f32 %v704, %v720
      %v728 = vadd.f32 %v705, %v720
      %v729 = vadd.f32 %v706, %v720
      %v730 = vadd.f32 %v707, %v720
      %v731 = vadd.f32 %v708, %v720
      %v732 = vadd.f32 %v709, %v720
      %v733 = vadd.f32 %v710, %v720
      %v734 = vadd.f32 %v711, %v720
      %v735 = vadd.f32 %v712, %v720
      %v736 = vadd.f32 %v713, %v720
      %v737 = vadd.f32 %v714, %v720
      %v738 = vmax.f32 %v722, 0.0
      %v739 = vmax.f32 %v723, 0.0
      %v740 = vmax.f32 %v724, 0.0
      %v741 = vmax.f32 %v725, 0.0
      %v742 = vmax.f32 %v726, 0.0
      %v743 = vmax.f32 %v727, 0.0
      %v744 = vmax.f32 %v728, 0.0
      %v745 = vmax.f32 %v729, 0.0
      %v746 = vmax.f32 %v730, 0.0
      %v747 = vmax.f32 %v731, 0.0
      %v748 = vmax.f32 %v732, 0.0
      %v749 = vmax.f32 %v733, 0.0
      %v750 = vmax.f32 %v734, 0.0
      %v751 = vmax.f32 %v735, 0.0
      %v752 = vmax.f32 %v736, 0.0
      %v753 = vmax.f32 %v737, 0.0
      %v754 = vld [vmem:[%s3] sm:$0xff]
      %v755 = vld [vmem:[%s3 + $0x8] sm:$0xff]
      %v756 = vld [vmem:[%s3 + $0x10] sm:$0xff]
      %v757 = vld [vmem:[%s3 + $0x18] sm:$0xff]
      %v758 = vld [vmem:[%s3 + $0x20] sm:$0xff]
      %v759 = vld [vmem:[%s3 + $0x28] sm:$0xff]
      %v760 = vld [vmem:[%s3 + $0x30] sm:$0xff]
      %v761 = vld [vmem:[%s3 + $0x38] sm:$0xff]
      %v762 = vld [vmem:[%s3 + $0x40] sm:$0xff]
      %v763 = vld [vmem:[%s3 + $0x48] sm:$0xff]
      %v764 = vld [vmem:[%s3 + $0x50] sm:$0xff]
      %v765 = vld [vmem:[%s3 + $0x58] sm:$0xff]
      %v766 = vld [vmem:[%s3 + $0x60] sm:$0xff]
      %v767 = vld [vmem:[%s3 + $0x68] sm:$0xff]
      %v768 = vld [vmem:[%s3 + $0x70] sm:$0xff]
      %v769 = vld [vmem:[%s3 + $0x78] sm:$0xff]
      %v770 = vld [vmem:[%s4] sm:$0x1]
      %v772 = vlaneseq
      %v773 = vshrl.u32 %v772, 7
      %v774 = vsub.s32 0, %v773
      %v775 = vrot.slane %v770, %v774
      %777 = vmatprep.subr.mxu0 0.0
      %778 = vmatpush1.msra.mxu0 %v769
      %779 = vmatprep.subr.mxu0 0.0
      %780 = vmatpush1.msra.mxu0 %v768
      %781 = vmatprep.subr.mxu0 0.0
      %782 = vmatpush1.msra.mxu0 %v767
      %783 = vmatprep.subr.mxu0 0.0
      %784 = vmatpush1.msra.mxu0 %v766
      %785 = vmatprep.subr.mxu0 0.0
      %786 = vmatpush1.msra.mxu0 %v765
      %787 = vmatprep.subr.mxu0 0.0
      %788 = vmatpush1.msra.mxu0 %v764
      %789 = vmatprep.subr.mxu0 0.0
      %790 = vmatpush1.msra.mxu0 %v763
      %791 = vmatprep.subr.mxu0 0.0
      %792 = vmatpush1.msra.mxu0 %v762
      %793 = vmatprep.subr.mxu0 0.0
      %794 = vmatpush1.msra.mxu0 %v761
      %795 = vmatprep.subr.mxu0 0.0
      %796 = vmatpush1.msra.mxu0 %v760
      %797 = vmatprep.subr.mxu0 0.0
      %798 = vmatpush1.msra.mxu0 %v759
      %799 = vmatprep.subr.mxu0 0.0
      %800 = vmatpush1.msra.mxu0 %v758
      %801 = vmatprep.subr.mxu0 0.0
      %802 = vmatpush1.msra.mxu0 %v757
      %803 = vmatprep.subr.mxu0 0.0
      %804 = vmatpush1.msra.mxu0 %v756
      %805 = vmatprep.subr.mxu0 0.0
      %806 = vmatpush1.msra.mxu0 %v755
      %807 = vmatprep.subr.mxu0 0.0
      %808 = vmatpush1.msra.mxu0 %v754
      %809 = vmatprep.subr.mxu0 0.0
      %810 = vmatpush2.msra.mxu0 0.0
      %811 = vmatprep.subr.mxu0 0.0
      %812 = vmatpush2.msra.mxu0 0.0
      %813 = vmatprep.subr.mxu0 0.0
      %814 = vmatpush2.msra.mxu0 0.0
      %815 = vmatprep.subr.mxu0 0.0
      %816 = vmatpush2.msra.mxu0 0.0
      %817 = vmatprep.subr.mxu0 0.0
      %818 = vmatpush2.msra.mxu0 0.0
      %819 = vmatprep.subr.mxu0 0.0
      %820 = vmatpush2.msra.mxu0 0.0
      %821 = vmatprep.subr.mxu0 0.0
      %822 = vmatpush2.msra.mxu0 0.0
      %823 = vmatprep.subr.mxu0 0.0
      %824 = vmatpush2.msra.mxu0 0.0
      %825 = vmatprep.subr.mxu0 0.0
      %826 = vmatpush2.msra.mxu0 0.0
      %827 = vmatprep.subr.mxu0 0.0
      %828 = vmatpush2.msra.mxu0 0.0
      %829 = vmatprep.subr.mxu0 0.0
      %830 = vmatpush2.msra.mxu0 0.0
      %831 = vmatprep.subr.mxu0 0.0
      %832 = vmatpush2.msra.mxu0 0.0
      %833 = vmatprep.subr.mxu0 0.0
      %834 = vmatpush2.msra.mxu0 0.0
      %835 = vmatprep.subr.mxu0 0.0
      %836 = vmatpush2.msra.mxu0 0.0
      %837 = vmatprep.subr.mxu0 0.0
      %838 = vmatpush2.msra.mxu0 0.0
      %839 = vmatprep.subr.mxu0 0.0
      %840 = vmatpush2.msra.mxu0 0.0
      %841 = vmatprep.mubr.f32.mxu0 0.0
      %842 = vmatmul.mubr.f32.gmra.mxu0 %v738
      %v843 = vpop.f32.mrf.mxu0
      %v844 = vadd.f32 %v775, %v843
      %v845 = vpop.f32.mrf.mxu0
      %846 = vmatprep.mubr.f32.mxu0 0.0
      %847 = vmatmul.mubr.f32.gmra.mxu0 %v739
      %v848 = vpop.f32.mrf.mxu0
      %v849 = vadd.f32 %v775, %v848
      %v850 = vpop.f32.mrf.mxu0
      %851 = vmatprep.mubr.f32.mxu0 0.0
      %852 = vmatmul.mubr.f32.gmra.mxu0 %v740
      %v853 = vpop.f32.mrf.mxu0
      %v854 = vadd.f32 %v775, %v853
      %v855 = vpop.f32.mrf.mxu0
      %856 = vmatprep.mubr.f32.mxu0 0.0
      %857 = vmatmul.mubr.f32.gmra.mxu0 %v741
      %v858 = vpop.f32.mrf.mxu0
      %v859 = vadd.f32 %v775, %v858
      %v860 = vpop.f32.mrf.mxu0
      %861 = vmatprep.mubr.f32.mxu0 0.0
      %862 = vmatmul.mubr.f32.gmra.mxu0 %v742
      %v863 = vpop.f32.mrf.mxu0
      %v864 = vadd.f32 %v775, %v863
      %v865 = vpop.f32.mrf.mxu0
      %866 = vmatprep.mubr.f32.mxu0 0.0
      %867 = vmatmul.mubr.f32.gmra.mxu0 %v743
      %v868 = vpop.f32.mrf.mxu0
      %v869 = vadd.f32 %v775, %v868
      %v870 = vpop.f32.mrf.mxu0
      %871 = vmatprep.mubr.f32.mxu0 0.0
      %872 = vmatmul.mubr.f32.gmra.mxu0 %v744
      %v873 = vpop.f32.mrf.mxu0
      %v874 = vadd.f32 %v775, %v873
      %v875 = vpop.f32.mrf.mxu0
      %876 = vmatprep.mubr.f32.mxu0 0.0
      %877 = vmatmul.mubr.f32.gmra.mxu0 %v745
      %v878 = vpop.f32.mrf.mxu0
      %v879 = vadd.f32 %v775, %v878
      %v880 = vpop.f32.mrf.mxu0
      %881 = vmatprep.mubr.f32.mxu0 0.0
      %882 = vmatmul.mubr.f32.gmra.mxu0 %v746
      %v883 = vpop.f32.mrf.mxu0
      %v884 = vadd.f32 %v775, %v883
      %v885 = vpop.f32.mrf.mxu0
      %886 = vmatprep.mubr.f32.mxu0 0.0
      %887 = vmatmul.mubr.f32.gmra.mxu0 %v747
      %v888 = vpop.f32.mrf.mxu0
      %v889 = vadd.f32 %v775, %v888
      %v890 = vpop.f32.mrf.mxu0
      %891 = vmatprep.mubr.f32.mxu0 0.0
      %892 = vmatmul.mubr.f32.gmra.mxu0 %v748
      %v893 = vpop.f32.mrf.mxu0
      %v894 = vadd.f32 %v775, %v893
      %v895 = vpop.f32.mrf.mxu0
      %896 = vmatprep.mubr.f32.mxu0 0.0
      %897 = vmatmul.mubr.f32.gmra.mxu0 %v749
      %v898 = vpop.f32.mrf.mxu0
      %v899 = vadd.f32 %v775, %v898
      %v900 = vpop.f32.mrf.mxu0
      %901 = vmatprep.mubr.f32.mxu0 0.0
      %902 = vmatmul.mubr.f32.gmra.mxu0 %v750
      %v903 = vpop.f32.mrf.mxu0
      %v904 = vadd.f32 %v775, %v903
      %v905 = vpop.f32.mrf.mxu0
      %906 = vmatprep.mubr.f32.mxu0 0.0
      %907 = vmatmul.mubr.f32.gmra.mxu0 %v751
      %v908 = vpop.f32.mrf.mxu0
      %v909 = vadd.f32 %v775, %v908
      %v910 = vpop.f32.mrf.mxu0
      %911 = vmatprep.mubr.f32.mxu0 0.0
      %912 = vmatmul.mubr.f32.gmra.mxu0 %v752
      %v913 = vpop.f32.mrf.mxu0
      %v914 = vadd.f32 %v775, %v913
      %v915 = vpop.f32.mrf.mxu0
      %916 = vmatprep.mubr.f32.mxu0 0.0
      %917 = vmatmul.mubr.f32.gmra.mxu0 %v753
      %v918 = vpop.f32.mrf.mxu0
      %v919 = vadd.f32 %v775, %v918
      %v920 = vpop.f32.mrf.mxu0
      %921 = vdwg.mxu0
      %v922 = vmax.f32 %v844, 0.0
      %v923 = vmax.f32 %v849, 0.0
      %v924 = vmax.f32 %v854, 0.0
      %v925 = vmax.f32 %v859, 0.0
      %v926 = vmax.f32 %v864, 0.0
      %v927 = vmax.f32 %v869, 0.0
      %v928 = vmax.f32 %v874, 0.0
      %v929 = vmax.f32 %v879, 0.0
      %v930 = vmax.f32 %v884, 0.0
      %v931 = vmax.f32 %v889, 0.0
      %v932 = vmax.f32 %v894, 0.0
      %v933 = vmax.f32 %v899, 0.0
      %v934 = vmax.f32 %v904, 0.0
      %v935 = vmax.f32 %v909, 0.0
      %v936 = vmax.f32 %v914, 0.0
      %v937 = vmax.f32 %v919, 0.0
      %v938 = vld [vmem:[%s5] sm:$0xff]
      %v939 = vld [vmem:[%s5 + $0x8] sm:$0xff]
      %v940 = vld [vmem:[%s5 + $0x10] sm:$0xff]
      %v941 = vld [vmem:[%s5 + $0x18] sm:$0xff]
      %v942 = vld [vmem:[%s5 + $0x20] sm:$0xff]
      %v943 = vld [vmem:[%s5 + $0x28] sm:$0xff]
      %v944 = vld [vmem:[%s5 + $0x30] sm:$0xff]
      %v945 = vld [vmem:[%s5 + $0x38] sm:$0xff]
      %v946 = vld [vmem:[%s5 + $0x40] sm:$0xff]
      %v947 = vld [vmem:[%s5 + $0x48] sm:$0xff]
      %v948 = vld [vmem:[%s5 + $0x50] sm:$0xff]
      %v949 = vld [vmem:[%s5 + $0x58] sm:$0xff]
      %v950 = vld [vmem:[%s5 + $0x60] sm:$0xff]
      %v951 = vld [vmem:[%s5 + $0x68] sm:$0xff]
      %v952 = vld [vmem:[%s5 + $0x70] sm:$0xff]
      %v953 = vld [vmem:[%s5 + $0x78] sm:$0xff]
      %v954 = vld [vmem:[%s6] sm:$0x1]
      %v956 = vlaneseq
      %v957 = vshrl.u32 %v956, 7
      %v958 = vsub.s32 0, %v957
      %v959 = vrot.slane %v954, %v958
      %961 = vmatprep.subr.mxu0 0.0
      %962 = vmatpush1.msra.mxu0 %v953
      %963 = vmatprep.subr.mxu0 0.0
      %964 = vmatpush1.msra.mxu0 %v952
      %965 = vmatprep.subr.mxu0 0.0
      %966 = vmatpush1.msra.mxu0 %v951
      %967 = vmatprep.subr.mxu0 0.0
      %968 = vmatpush1.msra.mxu0 %v950
      %969 = vmatprep.subr.mxu0 0.0
      %970 = vmatpush1.msra.mxu0 %v949
      %971 = vmatprep.subr.mxu0 0.0
      %972 = vmatpush1.msra.mxu0 %v948
      %973 = vmatprep.subr.mxu0 0.0
      %974 = vmatpush1.msra.mxu0 %v947
      %975 = vmatprep.subr.mxu0 0.0
      %976 = vmatpush1.msra.mxu0 %v946
      %977 = vmatprep.subr.mxu0 0.0
      %978 = vmatpush1.msra.mxu0 %v945
      %979 = vmatprep.subr.mxu0 0.0
      %980 = vmatpush1.msra.mxu0 %v944
      %981 = vmatprep.subr.mxu0 0.0
      %982 = vmatpush1.msra.mxu0 %v943
      %983 = vmatprep.subr.mxu0 0.0
      %984 = vmatpush1.msra.mxu0 %v942
      %985 = vmatprep.subr.mxu0 0.0
      %986 = vmatpush1.msra.mxu0 %v941
      %987 = vmatprep.subr.mxu0 0.0
      %988 = vmatpush1.msra.mxu0 %v940
      %989 = vmatprep.subr.mxu0 0.0
      %990 = vmatpush1.msra.mxu0 %v939
      %991 = vmatprep.subr.mxu0 0.0
      %992 = vmatpush1.msra.mxu0 %v938
      %993 = vmatprep.subr.mxu0 0.0
      %994 = vmatpush2.msra.mxu0 0.0
      %995 = vmatprep.subr.mxu0 0.0
      %996 = vmatpush2.msra.mxu0 0.0
      %997 = vmatprep.subr.mxu0 0.0
      %998 = vmatpush2.msra.mxu0 0.0
      %999 = vmatprep.subr.mxu0 0.0
      %1000 = vmatpush2.msra.mxu0 0.0
      %1001 = vmatprep.subr.mxu0 0.0
      %1002 = vmatpush2.msra.mxu0 0.0
      %1003 = vmatprep.subr.mxu0 0.0
      %1004 = vmatpush2.msra.mxu0 0.0
      %1005 = vmatprep.subr.mxu0 0.0
      %1006 = vmatpush2.msra.mxu0 0.0
      %1007 = vmatprep.subr.mxu0 0.0
      %1008 = vmatpush2.msra.mxu0 0.0
      %1009 = vmatprep.subr.mxu0 0.0
      %1010 = vmatpush2.msra.mxu0 0.0
      %1011 = vmatprep.subr.mxu0 0.0
      %1012 = vmatpush2.msra.mxu0 0.0
      %1013 = vmatprep.subr.mxu0 0.0
      %1014 = vmatpush2.msra.mxu0 0.0
      %1015 = vmatprep.subr.mxu0 0.0
      %1016 = vmatpush2.msra.mxu0 0.0
      %1017 = vmatprep.subr.mxu0 0.0
      %1018 = vmatpush2.msra.mxu0 0.0
      %1019 = vmatprep.subr.mxu0 0.0
      %1020 = vmatpush2.msra.mxu0 0.0
      %1021 = vmatprep.subr.mxu0 0.0
      %1022 = vmatpush2.msra.mxu0 0.0
      %1023 = vmatprep.subr.mxu0 0.0
      %1024 = vmatpush2.msra.mxu0 0.0
      %1025 = vmatprep.mubr.f32.mxu0 0.0
      %1026 = vmatmul.mubr.f32.gmra.mxu0 %v922
      %v1027 = vpop.f32.mrf.mxu0
      %v1028 = vadd.f32 %v959, %v1027
      %v1029 = vpop.f32.mrf.mxu0
      %1030 = vmatprep.mubr.f32.mxu0 0.0
      %1031 = vmatmul.mubr.f32.gmra.mxu0 %v923
      %v1032 = vpop.f32.mrf.mxu0
      %v1033 = vadd.f32 %v959, %v1032
      %v1034 = vpop.f32.mrf.mxu0
      %1035 = vmatprep.mubr.f32.mxu0 0.0
      %1036 = vmatmul.mubr.f32.gmra.mxu0 %v924
      %v1037 = vpop.f32.mrf.mxu0
      %v1038 = vadd.f32 %v959, %v1037
      %v1039 = vpop.f32.mrf.mxu0
      %1040 = vmatprep.mubr.f32.mxu0 0.0
      %1041 = vmatmul.mubr.f32.gmra.mxu0 %v925
      %v1042 = vpop.f32.mrf.mxu0
      %v1043 = vadd.f32 %v959, %v1042
      %v1044 = vpop.f32.mrf.mxu0
      %1045 = vmatprep.mubr.f32.mxu0 0.0
      %1046 = vmatmul.mubr.f32.gmra.mxu0 %v926
      %v1047 = vpop.f32.mrf.mxu0
      %v1048 = vadd.f32 %v959, %v1047
      %v1049 = vpop.f32.mrf.mxu0
      %1050 = vmatprep.mubr.f32.mxu0 0.0
      %1051 = vmatmul.mubr.f32.gmra.mxu0 %v927
      %v1052 = vpop.f32.mrf.mxu0
      %v1053 = vadd.f32 %v959, %v1052
      %v1054 = vpop.f32.mrf.mxu0
      %1055 = vmatprep.mubr.f32.mxu0 0.0
      %1056 = vmatmul.mubr.f32.gmra.mxu0 %v928
      %v1057 = vpop.f32.mrf.mxu0
      %v1058 = vadd.f32 %v959, %v1057
      %v1059 = vpop.f32.mrf.mxu0
      %1060 = vmatprep.mubr.f32.mxu0 0.0
      %1061 = vmatmul.mubr.f32.gmra.mxu0 %v929
      %v1062 = vpop.f32.mrf.mxu0
      %v1063 = vadd.f32 %v959, %v1062
      %v1064 = vpop.f32.mrf.mxu0
      %1065 = vmatprep.mubr.f32.mxu0 0.0
      %1066 = vmatmul.mubr.f32.gmra.mxu0 %v930
      %v1067 = vpop.f32.mrf.mxu0
      %v1068 = vadd.f32 %v959, %v1067
      %v1069 = vpop.f32.mrf.mxu0
      %1070 = vmatprep.mubr.f32.mxu0 0.0
      %1071 = vmatmul.mubr.f32.gmra.mxu0 %v931
      %v1072 = vpop.f32.mrf.mxu0
      %v1073 = vadd.f32 %v959, %v1072
      %v1074 = vpop.f32.mrf.mxu0
      %1075 = vmatprep.mubr.f32.mxu0 0.0
      %1076 = vmatmul.mubr.f32.gmra.mxu0 %v932
      %v1077 = vpop.f32.mrf.mxu0
      %v1078 = vadd.f32 %v959, %v1077
      %v1079 = vpop.f32.mrf.mxu0
      %1080 = vmatprep.mubr.f32.mxu0 0.0
      %1081 = vmatmul.mubr.f32.gmra.mxu0 %v933
      %v1082 = vpop.f32.mrf.mxu0
      %v1083 = vadd.f32 %v959, %v1082
      %v1084 = vpop.f32.mrf.mxu0
      %1085 = vmatprep.mubr.f32.mxu0 0.0
      %1086 = vmatmul.mubr.f32.gmra.mxu0 %v934
      %v1087 = vpop.f32.mrf.mxu0
      %v1088 = vadd.f32 %v959, %v1087
      %v1089 = vpop.f32.mrf.mxu0
      %1090 = vmatprep.mubr.f32.mxu0 0.0
      %1091 = vmatmul.mubr.f32.gmra.mxu0 %v935
      %v1092 = vpop.f32.mrf.mxu0
      %v1093 = vadd.f32 %v959, %v1092
      %v1094 = vpop.f32.mrf.mxu0
      %1095 = vmatprep.mubr.f32.mxu0 0.0
      %1096 = vmatmul.mubr.f32.gmra.mxu0 %v936
      %v1097 = vpop.f32.mrf.mxu0
      %v1098 = vadd.f32 %v959, %v1097
      %v1099 = vpop.f32.mrf.mxu0
      %1100 = vmatprep.mubr.f32.mxu0 0.0
      %1101 = vmatmul.mubr.f32.gmra.mxu0 %v937
      %v1102 = vpop.f32.mrf.mxu0
      %v1103 = vadd.f32 %v959, %v1102
      %v1104 = vpop.f32.mrf.mxu0
      %1105 = vdwg.mxu0
      %vm1106 = vcmask 15360
      %1107 = vst.msk [vmem:[%s280] sm:$0xff] %vm1106, %v1028
      %1108 = vst.msk [vmem:[%s280 + $0x8] sm:$0xff] %vm1106, %v1033
      %1109 = vst.msk [vmem:[%s280 + $0x10] sm:$0xff] %vm1106, %v1038
      %1110 = vst.msk [vmem:[%s280 + $0x18] sm:$0xff] %vm1106, %v1043
      %1111 = vst.msk [vmem:[%s280 + $0x20] sm:$0xff] %vm1106, %v1048
      %1112 = vst.msk [vmem:[%s280 + $0x28] sm:$0xff] %vm1106, %v1053
      %1113 = vst.msk [vmem:[%s280 + $0x30] sm:$0xff] %vm1106, %v1058
      %1114 = vst.msk [vmem:[%s280 + $0x38] sm:$0xff] %vm1106, %v1063
      %1115 = vst.msk [vmem:[%s280 + $0x40] sm:$0xff] %vm1106, %v1068
      %1116 = vst.msk [vmem:[%s280 + $0x48] sm:$0xff] %vm1106, %v1073
      %1117 = vst.msk [vmem:[%s280 + $0x50] sm:$0xff] %vm1106, %v1078
      %1118 = vst.msk [vmem:[%s280 + $0x58] sm:$0xff] %vm1106, %v1083
      %1119 = vst.msk [vmem:[%s280 + $0x60] sm:$0xff] %vm1106, %v1088
      %1120 = vst.msk [vmem:[%s280 + $0x68] sm:$0xff] %vm1106, %v1093
      %1121 = vst.msk [vmem:[%s280 + $0x70] sm:$0xff] %vm1106, %v1098
      %1122 = vst.msk [vmem:[%s280 + $0x78] sm:$0xff] %vm1106, %v1103
      %s1123 = smul.u32 16, %s18
      %p1124 = scmp.lt.s32.totalorder %s1123, 31
      %s1125 = scalar_select %p1124, %s1123, 31
      %s1126 = smul.addr %s1125, 8
      %s1127 = scalar_lea.vmem %s7, %s1126
      // Predicated region
      $region49: #{mlp_forward.1} parent=47 // pred_check
        %p1128 = pneg %p188
      $region50: #{mlp_forward.1} parent=47 // pred_check_branch
        %1130 = sbr.rel (%p1128) target = $region52
      $region51: #{mlp_forward.1} parent=47 // pred_region
        %s1131 = smul.u32 16, %s18
      $region52: #{mlp_forward.1} parent=47 // pred_fallthru
        _
    $region48: #{mlp_forward.1} parent=5 // pred_fallthru
      _
    %p1132 = scmp.le.s32.totalorder 2, %s13
    // Predicated region
    $region53: #{mlp_forward.1} parent=5 // pred_check
      %p1133 = pneg %p1132
    $region54: #{mlp_forward.1} parent=5 // pred_check_branch
      %1135 = sbr.rel (%p1133) target = $region56
    $region55: #{mlp_forward.1} parent=5 // pred_region
      %s1136 = ssub.s32 %s13, 2
      // Predicated region
      $region57: #{mlp_forward.1} parent=55 // pred_check
        %p1137 = pneg %p194
      $region58: #{mlp_forward.1} parent=55 // pred_check_branch
        %1139 = sbr.rel (%p1137) target = $region60
      $region59: #{mlp_forward.1} parent=55 // pred_region
        %s1140 = smul.u32 16, %s19
        %p1141 = scmp.lt.s32.totalorder %s1140, 31
        %s1142 = scalar_select %p1141, %s1140, 31
        %s1143 = smul.addr %s1142, 8
        %s1144 = scalar_lea.vmem %s7, %s1143
      $region60: #{mlp_forward.1} parent=55 // pred_fallthru
        _
    $region56: #{mlp_forward.1} parent=5 // pred_fallthru
      _
  $region6: #{mlp_forward.1} parent=0 // loop_footer
    %s17 = sadd.s32 1, %s13
  $region7: #{mlp_forward.1} parent=0 // loop_footer_branch
    %12 = sbr.rel target = $region3
  $region8: #{mlp_forward.1} parent=0 // loop_exit
    _

</llo_original>
